<compile_context>
chip_gen: v7x
topology: tpu7x:2x2x1
jax: 0.10.0
libtpu: 0.0.40
codegen_flags: <defaults>
</compile_context>

<pallas_src>
import functools

import jax
import jax.numpy as jnp
from jax.experimental import pallas as pl
from jax.experimental.pallas import tpu as pltpu


def _round_up(x, m):
    return ((x + m - 1) // m) * m


def _actor_disturb_kernel(s_ref, cd_ref, a_ref,
                          w1s_ref, w1c_ref, w1a_ref, b1_ref,
                          w2_ref, b2_ref, w3_ref, b3_ref,
                          out_ref, *, phi):
    # s_ref:  (TB, obs_dim), cd_ref: (TB, cd_dim), a_ref: (TB, action_dim)
    # w1*_ref: row-slices of the first-layer weight; b*_ref: (1, out) biases.
    a = a_ref[...]

    # Layer 1 (concat fused): [s, cd, a] @ W1 == s@W1s + cd@W1c + a@W1a
    h1 = (jnp.dot(s_ref[...], w1s_ref[...], preferred_element_type=jnp.float32)
          + jnp.dot(cd_ref[...], w1c_ref[...], preferred_element_type=jnp.float32)
          + jnp.dot(a, w1a_ref[...], preferred_element_type=jnp.float32)
          + b1_ref[...])
    h1 = jnp.maximum(h1, 0.0)

    # Layer 2: Linear + ReLU
    h2 = jnp.dot(h1, w2_ref[...], preferred_element_type=jnp.float32) + b2_ref[...]
    h2 = jnp.maximum(h2, 0.0)

    # Layer 3: Linear + Tanh
    t = jnp.tanh(jnp.dot(h2, w3_ref[...], preferred_element_type=jnp.float32)
                 + b3_ref[...])

    # Perturbation + clamp.
    # TODO(synk): hard-codes max_action = 1 (phi*tanh and clip bounds), matching
    # the reference module which assumes an action space of [-1, 1].
    out_ref[...] = jnp.clip(phi * t + a, -1.0, 1.0).astype(out_ref.dtype)


def actor_disturb_forward(states, inv_countdowns, actions, params,
                          phi=0.05, block_batch=512):
    """JAX/Pallas equivalent of Actor_disturb.forward."""
    w1, b1, w2, b2, w3, b3 = params
    batch = states.shape[0]
    obs_dim = states.shape[1]
    cd_dim = inv_countdowns.shape[1]
    action_dim = actions.shape[1]

    # Split W1 by rows once (tiny, done in the wrapper) so the concat fuses
    # into the kernel as three partial matmuls.
    w1s = w1[:obs_dim]
    w1c = w1[obs_dim:obs_dim + cd_dim]
    w1a = w1[obs_dim + cd_dim:]

    # Batch tile: multiple of 8 sublanes, capped so the per-step working set
    # (a few hundred KB at these feature dims) fits comfortably in scoped VMEM
    # on all of v5e/v6e/v7x while still amortizing the ~0.35 us/step overhead.
    tb = min(block_batch, _round_up(batch, 8))
    padded = _round_up(batch, tb)
    if padded != batch:
        pad = padded - batch
        states = jnp.pad(states, ((0, pad), (0, 0)))
        inv_countdowns = jnp.pad(inv_countdowns, ((0, pad), (0, 0)))
        actions_in = jnp.pad(actions, ((0, pad), (0, 0)))
    else:
        actions_in = actions

    grid = (padded // tb,)

    def row_spec(d):
        # Batch-tiled activations: block i covers rows [i*tb, (i+1)*tb).
        return pl.BlockSpec((tb, d), lambda i: (i, 0))

    def rep_spec(arr):
        # Weights/biases: same (full) block for every grid step -> VMEM-resident.
        return pl.BlockSpec(arr.shape, lambda i: (0, 0))

    kernel = functools.partial(_actor_disturb_kernel, phi=phi)

    out = pl.pallas_call(
        kernel,
        out_shape=jax.ShapeDtypeStruct((padded, action_dim), jnp.float32),
        grid=grid,
        in_specs=[row_spec(obs_dim), row_spec(cd_dim), row_spec(action_dim),
                  rep_spec(w1s), rep_spec(w1c), rep_spec(w1a), rep_spec(b1),
                  rep_spec(w2), rep_spec(b2),
                  rep_spec(w3), rep_spec(b3)],
        out_specs=row_spec(action_dim),
        compiler_params=pltpu.CompilerParams(
            dimension_semantics=("parallel",)),
    )(states, inv_countdowns, actions_in,
      w1s, w1c, w1a, b1, w2, b2, w3, b3)

    return out[:batch] if padded != batch else out


def init_params(key, state_dim, action_dim, hidden_dim):
    """Deterministic synthetic parameter init (shapes follow the torch module)."""
    in_dim = state_dim + action_dim
    dims = [(in_dim, hidden_dim[0]),
            (hidden_dim[0], hidden_dim[1]),
            (hidden_dim[1], action_dim)]
    params = []
    for din, dout in dims:
        kw, kb, key = jax.random.split(key, 3)
        bound = 1.0 / jnp.sqrt(din)
        # (in, out) layout (transpose of torch.nn.Linear's (out, in))
        w = jax.random.uniform(kw, (din, dout), jnp.float32, -bound, bound)
        b = jax.random.uniform(kb, (1, dout), jnp.float32, -bound, bound)
        params += [w, b]
    return tuple(params)


def _reference(states, inv_countdowns, actions, params, phi):
    w1, b1, w2, b2, w3, b3 = params
    x = jnp.concatenate([states, inv_countdowns, actions], axis=1)
    h = jnp.maximum(x @ w1 + b1, 0.0)
    h = jnp.maximum(h @ w2 + b2, 0.0)
    return jnp.clip(phi * jnp.tanh(h @ w3 + b3) + actions, -1.0, 1.0)


if __name__ == "__main__":
    # Small problem: state_dim = 12 (states: 8 + inv_countdowns: 4), action_dim = 4
    state_dim = 12
    cd_dim = 4
    obs_dim = state_dim - cd_dim
    action_dim = 4
    hidden_dim = (32, 32)
    phi = 0.05

    key = jax.random.PRNGKey(0)
    k_s, k_c, k_a, k_p = jax.random.split(key, 4)
    params = init_params(k_p, state_dim, action_dim, hidden_dim)

    # Case 1: batch divisible by the sublane tile.
    batch = 8
    states = jax.random.normal(k_s, (batch, obs_dim), jnp.float32)
    inv_countdowns = jax.random.uniform(k_c, (batch, cd_dim), jnp.float32)
    actions = jnp.clip(jax.random.normal(k_a, (batch, action_dim), jnp.float32),
                       -1.0, 1.0)

    out = actor_disturb_forward(states, inv_countdowns, actions, params, phi=phi)
    out = jax.block_until_ready(out)
    ref = _reference(states, inv_countdowns, actions, params, phi)
    assert out.shape == (batch, action_dim)
    assert jnp.allclose(out, ref, atol=1e-5), "mismatch vs reference (batch=8)"

    # Case 2: ragged batch exercises the pad + slice path.
    batch2 = 13
    k_s2, k_c2, k_a2 = jax.random.split(jax.random.PRNGKey(1), 3)
    states2 = jax.random.normal(k_s2, (batch2, obs_dim), jnp.float32)
    inv_countdowns2 = jax.random.uniform(k_c2, (batch2, cd_dim), jnp.float32)
    actions2 = jnp.clip(jax.random.normal(k_a2, (batch2, action_dim), jnp.float32),
                        -1.0, 1.0)
    out2 = jax.block_until_ready(
        actor_disturb_forward(states2, inv_countdowns2, actions2, params, phi=phi))
    ref2 = _reference(states2, inv_countdowns2, actions2, params, phi)
    assert out2.shape == (batch2, action_dim)
    assert jnp.allclose(out2, ref2, atol=1e-5), "mismatch vs reference (batch=13)"

    print("KERNEL_OK")
</pallas_src>

<mosaic_0001>
module attributes {stable_mosaic.version = 11 : i64} {
  func.func @_actor_disturb_kernel(%arg0: i32, %arg1: memref<8x8xf32, #tpu.memory_space<vmem>>, %arg2: memref<8x4xf32, #tpu.memory_space<vmem>>, %arg3: memref<8x4xf32, #tpu.memory_space<vmem>>, %arg4: memref<8x32xf32, #tpu.memory_space<vmem>>, %arg5: memref<4x32xf32, #tpu.memory_space<vmem>>, %arg6: memref<4x32xf32, #tpu.memory_space<vmem>>, %arg7: memref<1x32xf32, #tpu.memory_space<vmem>>, %arg8: memref<32x32xf32, #tpu.memory_space<vmem>>, %arg9: memref<1x32xf32, #tpu.memory_space<vmem>>, %arg10: memref<32x4xf32, #tpu.memory_space<vmem>>, %arg11: memref<1x4xf32, #tpu.memory_space<vmem>>, %arg12: memref<8x4xf32, #tpu.memory_space<vmem>>) attributes {dimension_semantics = [#tpu.dimension_semantics<parallel>], iteration_bounds = array<i64: 1>, scalar_prefetch = 0 : i64, scratch_operands = 0 : i64, tpu.core_type = #tpu.core_type<tc>, window_params = [{transform_indices = @transform_0, window_bounds = array<i64: 8, 8>}, {transform_indices = @transform_1, window_bounds = array<i64: 8, 4>}, {transform_indices = @transform_2, window_bounds = array<i64: 8, 4>}, {pipeline_mode = #tpu.pipeline_mode<synchronous>, transform_indices = @transform_3, window_bounds = array<i64: 8, 32>}, {pipeline_mode = #tpu.pipeline_mode<synchronous>, transform_indices = @transform_4, window_bounds = array<i64: 4, 32>}, {pipeline_mode = #tpu.pipeline_mode<synchronous>, transform_indices = @transform_5, window_bounds = array<i64: 4, 32>}, {pipeline_mode = #tpu.pipeline_mode<synchronous>, transform_indices = @transform_6, window_bounds = array<i64: 1, 32>}, {pipeline_mode = #tpu.pipeline_mode<synchronous>, transform_indices = @transform_7, window_bounds = array<i64: 32, 32>}, {pipeline_mode = #tpu.pipeline_mode<synchronous>, transform_indices = @transform_8, window_bounds = array<i64: 1, 32>}, {pipeline_mode = #tpu.pipeline_mode<synchronous>, transform_indices = @transform_9, window_bounds = array<i64: 32, 4>}, {pipeline_mode = #tpu.pipeline_mode<synchronous>, transform_indices = @transform_10, window_bounds = array<i64: 1, 4>}, {transform_indices = @transform_11, window_bounds = array<i64: 8, 4>}]} {
    %c0 = arith.constant 0 : index
    %c0_0 = arith.constant 0 : index
    %0 = vector.load %arg3[%c0, %c0_0] : memref<8x4xf32, #tpu.memory_space<vmem>>, vector<8x4xf32>
    %c0_1 = arith.constant 0 : index
    %c0_2 = arith.constant 0 : index
    %1 = vector.load %arg1[%c0_1, %c0_2] : memref<8x8xf32, #tpu.memory_space<vmem>>, vector<8x8xf32>
    %c0_3 = arith.constant 0 : index
    %c0_4 = arith.constant 0 : index
    %2 = vector.load %arg4[%c0_3, %c0_4] : memref<8x32xf32, #tpu.memory_space<vmem>>, vector<8x32xf32>
    %cst = arith.constant dense<0.000000e+00> : vector<8x32xf32>
    %3 = tpu.matmul %1, %2, %cst {dimension_numbers = #tpu.dot_dimension_numbers<[1], [0], [0], [1], [0, 0, 1, 1], [], []>} : vector<8x8xf32>, vector<8x32xf32>, vector<8x32xf32> -> vector<8x32xf32>
    %c0_5 = arith.constant 0 : index
    %c0_6 = arith.constant 0 : index
    %4 = vector.load %arg2[%c0_5, %c0_6] : memref<8x4xf32, #tpu.memory_space<vmem>>, vector<8x4xf32>
    %c0_7 = arith.constant 0 : index
    %c0_8 = arith.constant 0 : index
    %5 = vector.load %arg5[%c0_7, %c0_8] : memref<4x32xf32, #tpu.memory_space<vmem>>, vector<4x32xf32>
    %cst_9 = arith.constant dense<0.000000e+00> : vector<8x32xf32>
    %6 = tpu.matmul %4, %5, %cst_9 {dimension_numbers = #tpu.dot_dimension_numbers<[1], [0], [0], [1], [0, 0, 1, 1], [], []>} : vector<8x4xf32>, vector<4x32xf32>, vector<8x32xf32> -> vector<8x32xf32>
    %7 = arith.addf %3, %6 : vector<8x32xf32>
    %c0_10 = arith.constant 0 : index
    %c0_11 = arith.constant 0 : index
    %8 = vector.load %arg6[%c0_10, %c0_11] : memref<4x32xf32, #tpu.memory_space<vmem>>, vector<4x32xf32>
    %cst_12 = arith.constant dense<0.000000e+00> : vector<8x32xf32>
    %9 = tpu.matmul %0, %8, %cst_12 {dimension_numbers = #tpu.dot_dimension_numbers<[1], [0], [0], [1], [0, 0, 1, 1], [], []>} : vector<8x4xf32>, vector<4x32xf32>, vector<8x32xf32> -> vector<8x32xf32>
    %10 = arith.addf %7, %9 : vector<8x32xf32>
    %c0_13 = arith.constant 0 : index
    %c0_14 = arith.constant 0 : index
    %11 = vector.load %arg7[%c0_13, %c0_14] : memref<1x32xf32, #tpu.memory_space<vmem>>, vector<1x32xf32>
    %12 = vector.broadcast %11 : vector<1x32xf32> to vector<8x32xf32>
    %13 = arith.addf %10, %12 : vector<8x32xf32>
    %cst_15 = arith.constant 0.000000e+00 : f32
    %14 = vector.broadcast %cst_15 : f32 to vector<8x32xf32>
    %15 = arith.maximumf %13, %14 : vector<8x32xf32>
    %c0_16 = arith.constant 0 : index
    %c0_17 = arith.constant 0 : index
    %16 = vector.load %arg8[%c0_16, %c0_17] : memref<32x32xf32, #tpu.memory_space<vmem>>, vector<32x32xf32>
    %cst_18 = arith.constant dense<0.000000e+00> : vector<8x32xf32>
    %17 = tpu.matmul %15, %16, %cst_18 {dimension_numbers = #tpu.dot_dimension_numbers<[1], [0], [0], [1], [0, 0, 1, 1], [], []>} : vector<8x32xf32>, vector<32x32xf32>, vector<8x32xf32> -> vector<8x32xf32>
    %c0_19 = arith.constant 0 : index
    %c0_20 = arith.constant 0 : index
    %18 = vector.load %arg9[%c0_19, %c0_20] : memref<1x32xf32, #tpu.memory_space<vmem>>, vector<1x32xf32>
    %19 = vector.broadcast %18 : vector<1x32xf32> to vector<8x32xf32>
    %20 = arith.addf %17, %19 : vector<8x32xf32>
    %cst_21 = arith.constant 0.000000e+00 : f32
    %21 = vector.broadcast %cst_21 : f32 to vector<8x32xf32>
    %22 = arith.maximumf %20, %21 : vector<8x32xf32>
    %c0_22 = arith.constant 0 : index
    %c0_23 = arith.constant 0 : index
    %23 = vector.load %arg10[%c0_22, %c0_23] : memref<32x4xf32, #tpu.memory_space<vmem>>, vector<32x4xf32>
    %cst_24 = arith.constant dense<0.000000e+00> : vector<8x4xf32>
    %24 = tpu.matmul %22, %23, %cst_24 {dimension_numbers = #tpu.dot_dimension_numbers<[1], [0], [0], [1], [0, 0, 1, 1], [], []>} : vector<8x32xf32>, vector<32x4xf32>, vector<8x4xf32> -> vector<8x4xf32>
    %c0_25 = arith.constant 0 : index
    %c0_26 = arith.constant 0 : index
    %25 = vector.load %arg11[%c0_25, %c0_26] : memref<1x4xf32, #tpu.memory_space<vmem>>, vector<1x4xf32>
    %26 = vector.broadcast %25 : vector<1x4xf32> to vector<8x4xf32>
    %27 = arith.addf %24, %26 : vector<8x4xf32>
    %28 = math.tanh %27 : vector<8x4xf32>
    %cst_27 = arith.constant 5.000000e-02 : f32
    %29 = vector.broadcast %cst_27 : f32 to vector<8x4xf32>
    %30 = arith.mulf %29, %28 : vector<8x4xf32>
    %31 = arith.addf %30, %0 : vector<8x4xf32>
    %cst_28 = arith.constant -1.000000e+00 : f32
    %cst_29 = arith.constant 1.000000e+00 : f32
    %32 = vector.broadcast %cst_28 : f32 to vector<8x4xf32>
    %33 = arith.maximumf %32, %31 : vector<8x4xf32>
    %34 = vector.broadcast %cst_29 : f32 to vector<8x4xf32>
    %35 = arith.minimumf %34, %33 : vector<8x4xf32>
    %c0_30 = arith.constant 0 : index
    %c0_31 = arith.constant 0 : index
    %36 = vector.load %arg12[%c0_30, %c0_31] : memref<8x4xf32, #tpu.memory_space<vmem>>, vector<8x4xf32>
    tpu.vector_store %arg12[%c0_30, %c0_31], %35 {strides = array<i32>} : memref<8x4xf32, #tpu.memory_space<vmem>>, vector<8x4xf32>,
    return
  }
  func.func @transform_0(%arg0: i32) -> (i32, i32) {
    %c0_i32 = arith.constant 0 : i32
    %c0_i32_0 = arith.constant 0 : i32
    return %arg0, %c0_i32 : i32, i32
  }
  func.func @transform_1(%arg0: i32) -> (i32, i32) {
    %c0_i32 = arith.constant 0 : i32
    %c0_i32_0 = arith.constant 0 : i32
    return %arg0, %c0_i32 : i32, i32
  }
  func.func @transform_2(%arg0: i32) -> (i32, i32) {
    %c0_i32 = arith.constant 0 : i32
    %c0_i32_0 = arith.constant 0 : i32
    return %arg0, %c0_i32 : i32, i32
  }
  func.func @transform_3(%arg0: i32) -> (i32, i32) {
    %c0_i32 = arith.constant 0 : i32
    %c0_i32_0 = arith.constant 0 : i32
    %c0_i32_1 = arith.constant 0 : i32
    return %c0_i32, %c0_i32_0 : i32, i32
  }
  func.func @transform_4(%arg0: i32) -> (i32, i32) {
    %c0_i32 = arith.constant 0 : i32
    %c0_i32_0 = arith.constant 0 : i32
    %c0_i32_1 = arith.constant 0 : i32
    return %c0_i32, %c0_i32_0 : i32, i32
  }
  func.func @transform_5(%arg0: i32) -> (i32, i32) {
    %c0_i32 = arith.constant 0 : i32
    %c0_i32_0 = arith.constant 0 : i32
    %c0_i32_1 = arith.constant 0 : i32
    return %c0_i32, %c0_i32_0 : i32, i32
  }
  func.func @transform_6(%arg0: i32) -> (i32, i32) {
    %c0_i32 = arith.constant 0 : i32
    %c0_i32_0 = arith.constant 0 : i32
    %c0_i32_1 = arith.constant 0 : i32
    return %c0_i32, %c0_i32_0 : i32, i32
  }
  func.func @transform_7(%arg0: i32) -> (i32, i32) {
    %c0_i32 = arith.constant 0 : i32
    %c0_i32_0 = arith.constant 0 : i32
    %c0_i32_1 = arith.constant 0 : i32
    return %c0_i32, %c0_i32_0 : i32, i32
  }
  func.func @transform_8(%arg0: i32) -> (i32, i32) {
    %c0_i32 = arith.constant 0 : i32
    %c0_i32_0 = arith.constant 0 : i32
    %c0_i32_1 = arith.constant 0 : i32
    return %c0_i32, %c0_i32_0 : i32, i32
  }
  func.func @transform_9(%arg0: i32) -> (i32, i32) {
    %c0_i32 = arith.constant 0 : i32
    %c0_i32_0 = arith.constant 0 : i32
    %c0_i32_1 = arith.constant 0 : i32
    return %c0_i32, %c0_i32_0 : i32, i32
  }
  func.func @transform_10(%arg0: i32) -> (i32, i32) {
    %c0_i32 = arith.constant 0 : i32
    %c0_i32_0 = arith.constant 0 : i32
    %c0_i32_1 = arith.constant 0 : i32
    return %c0_i32, %c0_i32_0 : i32, i32
  }
  func.func @transform_11(%arg0: i32) -> (i32, i32) {
    %c0_i32 = arith.constant 0 : i32
    %c0_i32_0 = arith.constant 0 : i32
    return %arg0, %c0_i32 : i32, i32
  }
}

</mosaic_0001>

<llo_original>
// kernel: tpu_custom_call.1
$region0: #{tpu_custom_call.1}
  #allocation0 [shape = 'u32[]', space=smem, size = 0x4, offset = 0x4, fixed_abs, tag = 'smem constant byte address 0x4 - core index']
  #allocation1 [shape = 'u32[144,128]{1,0:T(1,128)}', space=vmem, size = 0x12000, scoped, tag = 'internal scratch']
  %s0 = inlined_call_operand.vmem [shape: f32[8,8], index: 0, kind: input, shape index: {}]
  %s1 = inlined_call_operand.vmem [shape: f32[8,4], index: 1, kind: input, shape index: {}]
  %s2 = inlined_call_operand.vmem [shape: f32[8,4], index: 2, kind: input, shape index: {}]
  %s3 = inlined_call_operand.vmem [shape: f32[8,32], index: 3, kind: input, shape index: {}]
  %s4 = inlined_call_operand.vmem [shape: f32[4,32], index: 4, kind: input, shape index: {}]
  %s5 = inlined_call_operand.vmem [shape: f32[4,32], index: 5, kind: input, shape index: {}]
  %s6 = inlined_call_operand.vmem [shape: f32[1,32], index: 6, kind: input, shape index: {}]
  %s7 = inlined_call_operand.vmem [shape: f32[32,32], index: 7, kind: input, shape index: {}]
  %s8 = inlined_call_operand.vmem [shape: f32[1,32], index: 8, kind: input, shape index: {}]
  %s9 = inlined_call_operand.vmem [shape: f32[32,4], index: 9, kind: input, shape index: {}]
  %s10 = inlined_call_operand.vmem [shape: f32[1,4], index: 10, kind: input, shape index: {}]
  %s11 = inlined_call_operand.vmem [shape: f32[8,4], index: 11, kind: output, shape index: {}]
  %s12 = sld [smem:[#allocation0]]
  $region54: #{tpu_custom_call.1} parent=0
    _
  %s14 = ssub.s32 1, %s12
  %s15 = scalar_select 0, %s14, %s12
  // Predicated region
  $region2: #{tpu_custom_call.1} parent=0 // pred_check
    _
  $region3: #{tpu_custom_call.1} parent=0 // pred_check_branch
    %17 = sbr.rel (0) target = $region5
  $region4: #{tpu_custom_call.1} parent=0 // pred_region
    _
  $region5: #{tpu_custom_call.1} parent=0 // pred_fallthru
    _
  // Predicated region
  $region6: #{tpu_custom_call.1} parent=0 // pred_check
    _
  $region7: #{tpu_custom_call.1} parent=0 // pred_check_branch
    %19 = sbr.rel (0) target = $region9
  $region8: #{tpu_custom_call.1} parent=0 // pred_region
    _
  $region9: #{tpu_custom_call.1} parent=0 // pred_fallthru
    _
  // Predicated region
  $region10: #{tpu_custom_call.1} parent=0 // pred_check
    _
  $region11: #{tpu_custom_call.1} parent=0 // pred_check_branch
    %21 = sbr.rel (0) target = $region13
  $region12: #{tpu_custom_call.1} parent=0 // pred_region
    _
  $region13: #{tpu_custom_call.1} parent=0 // pred_fallthru
    _
  // Predicated region
  $region14: #{tpu_custom_call.1} parent=0 // pred_check
    _
  $region15: #{tpu_custom_call.1} parent=0 // pred_check_branch
    %23 = sbr.rel (0) target = $region17
  $region16: #{tpu_custom_call.1} parent=0 // pred_region
    _
  $region17: #{tpu_custom_call.1} parent=0 // pred_fallthru
    _
  // Predicated region
  $region18: #{tpu_custom_call.1} parent=0 // pred_check
    _
  $region19: #{tpu_custom_call.1} parent=0 // pred_check_branch
    %25 = sbr.rel (0) target = $region21
  $region20: #{tpu_custom_call.1} parent=0 // pred_region
    _
  $region21: #{tpu_custom_call.1} parent=0 // pred_fallthru
    _
  // Predicated region
  $region22: #{tpu_custom_call.1} parent=0 // pred_check
    _
  $region23: #{tpu_custom_call.1} parent=0 // pred_check_branch
    %27 = sbr.rel (0) target = $region25
  $region24: #{tpu_custom_call.1} parent=0 // pred_region
    _
  $region25: #{tpu_custom_call.1} parent=0 // pred_fallthru
    _
  // Predicated region
  $region26: #{tpu_custom_call.1} parent=0 // pred_check
    _
  $region27: #{tpu_custom_call.1} parent=0 // pred_check_branch
    %29 = sbr.rel (0) target = $region29
  $region28: #{tpu_custom_call.1} parent=0 // pred_region
    _
  $region29: #{tpu_custom_call.1} parent=0 // pred_fallthru
    _
  // Predicated region
  $region30: #{tpu_custom_call.1} parent=0 // pred_check
    _
  $region31: #{tpu_custom_call.1} parent=0 // pred_check_branch
    %31 = sbr.rel (0) target = $region33
  $region32: #{tpu_custom_call.1} parent=0 // pred_region
    _
  $region33: #{tpu_custom_call.1} parent=0 // pred_fallthru
    _
  // Predicated region
  $region34: #{tpu_custom_call.1} parent=0 // pred_check
    _
  $region35: #{tpu_custom_call.1} parent=0 // pred_check_branch
    %33 = sbr.rel (0) target = $region37
  $region36: #{tpu_custom_call.1} parent=0 // pred_region
    _
  $region37: #{tpu_custom_call.1} parent=0 // pred_fallthru
    _
  // Predicated region
  $region38: #{tpu_custom_call.1} parent=0 // pred_check
    _
  $region39: #{tpu_custom_call.1} parent=0 // pred_check_branch
    %35 = sbr.rel (0) target = $region41
  $region40: #{tpu_custom_call.1} parent=0 // pred_region
    _
  $region41: #{tpu_custom_call.1} parent=0 // pred_fallthru
    _
  // Predicated region
  $region42: #{tpu_custom_call.1} parent=0 // pred_check
    _
  $region43: #{tpu_custom_call.1} parent=0 // pred_check_branch
    %37 = sbr.rel (0) target = $region45
  $region44: #{tpu_custom_call.1} parent=0 // pred_region
    _
  $region45: #{tpu_custom_call.1} parent=0 // pred_fallthru
    _
  %v38 = vld [vmem:[%s2] sm:$0xff]
  %v39 = vld [vmem:[%s0] sm:$0xff]
  %v40 = vld [vmem:[%s3] sm:$0xff]
  %v41 = vld [vmem:[%s1] sm:$0xff]
  %v42 = vld [vmem:[%s4] sm:$0xf]
  %vm43 = vcmask 31744
  %v45 = vsel %vm43, %v41, 0
  %vm47 = vcmask 1043456
  %v49 = vsel %vm47, %v42, 0
  %51 = vmatprep.subr.mxu0 0.0
  %52 = vmatpush1.msra.mxu0 %v49
  %53 = vmatprep.subr.mxu0 0.0
  %54 = vmatpush1.msra.mxu0 0.0
  %55 = vmatprep.subr.mxu0 0.0
  %56 = vmatpush1.msra.mxu0 0.0
  %57 = vmatprep.subr.mxu0 0.0
  %58 = vmatpush1.msra.mxu0 0.0
  %59 = vmatprep.subr.mxu0 0.0
  %60 = vmatpush1.msra.mxu0 0.0
  %61 = vmatprep.subr.mxu0 0.0
  %62 = vmatpush1.msra.mxu0 0.0
  %63 = vmatprep.subr.mxu0 0.0
  %64 = vmatpush1.msra.mxu0 0.0
  %65 = vmatprep.subr.mxu0 0.0
  %66 = vmatpush1.msra.mxu0 0.0
  %67 = vmatprep.subr.mxu0 0.0
  %68 = vmatpush1.msra.mxu0 0.0
  %69 = vmatprep.subr.mxu0 0.0
  %70 = vmatpush1.msra.mxu0 0.0
  %71 = vmatprep.subr.mxu0 0.0
  %72 = vmatpush1.msra.mxu0 0.0
  %73 = vmatprep.subr.mxu0 0.0
  %74 = vmatpush1.msra.mxu0 0.0
  %75 = vmatprep.subr.mxu0 0.0
  %76 = vmatpush1.msra.mxu0 0.0
  %77 = vmatprep.subr.mxu0 0.0
  %78 = vmatpush1.msra.mxu0 0.0
  %79 = vmatprep.subr.mxu0 0.0
  %80 = vmatpush1.msra.mxu0 0.0
  %81 = vmatprep.subr.mxu0 0.0
  %82 = vmatpush1.msra.mxu0 0.0
  %83 = vmatprep.subr.mxu0 0.0
  %84 = vmatpush1.msra.mxu0 0.0
  %85 = vmatprep.subr.mxu0 0.0
  %86 = vmatpush1.msra.mxu0 0.0
  %87 = vmatprep.subr.mxu0 0.0
  %88 = vmatpush1.msra.mxu0 0.0
  %89 = vmatprep.subr.mxu0 0.0
  %90 = vmatpush1.msra.mxu0 0.0
  %91 = vmatprep.subr.mxu0 0.0
  %92 = vmatpush1.msra.mxu0 0.0
  %93 = vmatprep.subr.mxu0 0.0
  %94 = vmatpush1.msra.mxu0 0.0
  %95 = vmatprep.subr.mxu0 0.0
  %96 = vmatpush1.msra.mxu0 0.0
  %97 = vmatprep.subr.mxu0 0.0
  %98 = vmatpush1.msra.mxu0 0.0
  %99 = vmatprep.subr.mxu0 0.0
  %100 = vmatpush1.msra.mxu0 0.0
  %101 = vmatprep.subr.mxu0 0.0
  %102 = vmatpush1.msra.mxu0 0.0
  %103 = vmatprep.subr.mxu0 0.0
  %104 = vmatpush1.msra.mxu0 0.0
  %105 = vmatprep.subr.mxu0 0.0
  %106 = vmatpush1.msra.mxu0 0.0
  %107 = vmatprep.subr.mxu0 0.0
  %108 = vmatpush1.msra.mxu0 0.0
  %109 = vmatprep.subr.mxu0 0.0
  %110 = vmatpush1.msra.mxu0 0.0
  %111 = vmatprep.subr.mxu0 0.0
  %112 = vmatpush1.msra.mxu0 0.0
  %113 = vmatprep.subr.mxu0 0.0
  %114 = vmatpush1.msra.mxu0 0.0
  %115 = vmatprep.mubr.f32.mxu0 0.0
  %116 = vmatmul.mubr.f32.gmra.mrb[0].mxu0 %v45
  %v117 = vpop.f32.mrb[0].mxu0
  %v118 = vadd.f32 0.0, %v117
  %v119 = vpop.f32.mrb[0].mxu0
  %120 = vdwg.mxu0
  %vm121 = vcmask 64512
  %v123 = vsel %vm121, %v39, 0
  %125 = vmatprep.subr.mxu0 0.0
  %126 = vmatpush1.msra.mxu0 %v40
  %127 = vmatprep.subr.mxu0 0.0
  %128 = vmatpush1.msra.mxu0 0.0
  %129 = vmatprep.subr.mxu0 0.0
  %130 = vmatpush1.msra.mxu0 0.0
  %131 = vmatprep.subr.mxu0 0.0
  %132 = vmatpush1.msra.mxu0 0.0
  %133 = vmatprep.subr.mxu0 0.0
  %134 = vmatpush1.msra.mxu0 0.0
  %135 = vmatprep.subr.mxu0 0.0
  %136 = vmatpush1.msra.mxu0 0.0
  %137 = vmatprep.subr.mxu0 0.0
  %138 = vmatpush1.msra.mxu0 0.0
  %139 = vmatprep.subr.mxu0 0.0
  %140 = vmatpush1.msra.mxu0 0.0
  %141 = vmatprep.subr.mxu0 0.0
  %142 = vmatpush1.msra.mxu0 0.0
  %143 = vmatprep.subr.mxu0 0.0
  %144 = vmatpush1.msra.mxu0 0.0
  %145 = vmatprep.subr.mxu0 0.0
  %146 = vmatpush1.msra.mxu0 0.0
  %147 = vmatprep.subr.mxu0 0.0
  %148 = vmatpush1.msra.mxu0 0.0
  %149 = vmatprep.subr.mxu0 0.0
  %150 = vmatpush1.msra.mxu0 0.0
  %151 = vmatprep.subr.mxu0 0.0
  %152 = vmatpush1.msra.mxu0 0.0
  %153 = vmatprep.subr.mxu0 0.0
  %154 = vmatpush1.msra.mxu0 0.0
  %155 = vmatprep.subr.mxu0 0.0
  %156 = vmatpush1.msra.mxu0 0.0
  %157 = vmatprep.subr.mxu0 0.0
  %158 = vmatpush1.msra.mxu0 0.0
  %159 = vmatprep.subr.mxu0 0.0
  %160 = vmatpush1.msra.mxu0 0.0
  %161 = vmatprep.subr.mxu0 0.0
  %162 = vmatpush1.msra.mxu0 0.0
  %163 = vmatprep.subr.mxu0 0.0
  %164 = vmatpush1.msra.mxu0 0.0
  %165 = vmatprep.subr.mxu0 0.0
  %166 = vmatpush1.msra.mxu0 0.0
  %167 = vmatprep.subr.mxu0 0.0
  %168 = vmatpush1.msra.mxu0 0.0
  %169 = vmatprep.subr.mxu0 0.0
  %170 = vmatpush1.msra.mxu0 0.0
  %171 = vmatprep.subr.mxu0 0.0
  %172 = vmatpush1.msra.mxu0 0.0
  %173 = vmatprep.subr.mxu0 0.0
  %174 = vmatpush1.msra.mxu0 0.0
  %175 = vmatprep.subr.mxu0 0.0
  %176 = vmatpush1.msra.mxu0 0.0
  %177 = vmatprep.subr.mxu0 0.0
  %178 = vmatpush1.msra.mxu0 0.0
  %179 = vmatprep.subr.mxu0 0.0
  %180 = vmatpush1.msra.mxu0 0.0
  %181 = vmatprep.subr.mxu0 0.0
  %182 = vmatpush1.msra.mxu0 0.0
  %183 = vmatprep.subr.mxu0 0.0
  %184 = vmatpush1.msra.mxu0 0.0
  %185 = vmatprep.subr.mxu0 0.0
  %186 = vmatpush1.msra.mxu0 0.0
  %187 = vmatprep.subr.mxu0 0.0
  %188 = vmatpush1.msra.mxu0 0.0
  %189 = vmatprep.mubr.f32.mxu0 0.0
  %190 = vmatmul.mubr.f32.gmra.mrb[0].mxu0 %v123
  %v191 = vpop.f32.mrb[0].mxu0
  %v192 = vadd.f32 %v118, %v191
  %v193 = vpop.f32.mrb[0].mxu0
  %194 = vdwg.mxu0
  %v195 = vld [vmem:[%s5] sm:$0xf]
  %v197 = vsel %vm43, %v38, 0
  %v200 = vsel %vm47, %v195, 0
  %202 = vmatprep.subr.mxu0 0.0
  %203 = vmatpush1.msra.mxu0 %v200
  %204 = vmatprep.subr.mxu0 0.0
  %205 = vmatpush1.msra.mxu0 0.0
  %206 = vmatprep.subr.mxu0 0.0
  %207 = vmatpush1.msra.mxu0 0.0
  %208 = vmatprep.subr.mxu0 0.0
  %209 = vmatpush1.msra.mxu0 0.0
  %210 = vmatprep.subr.mxu0 0.0
  %211 = vmatpush1.msra.mxu0 0.0
  %212 = vmatprep.subr.mxu0 0.0
  %213 = vmatpush1.msra.mxu0 0.0
  %214 = vmatprep.subr.mxu0 0.0
  %215 = vmatpush1.msra.mxu0 0.0
  %216 = vmatprep.subr.mxu0 0.0
  %217 = vmatpush1.msra.mxu0 0.0
  %218 = vmatprep.subr.mxu0 0.0
  %219 = vmatpush1.msra.mxu0 0.0
  %220 = vmatprep.subr.mxu0 0.0
  %221 = vmatpush1.msra.mxu0 0.0
  %222 = vmatprep.subr.mxu0 0.0
  %223 = vmatpush1.msra.mxu0 0.0
  %224 = vmatprep.subr.mxu0 0.0
  %225 = vmatpush1.msra.mxu0 0.0
  %226 = vmatprep.subr.mxu0 0.0
  %227 = vmatpush1.msra.mxu0 0.0
  %228 = vmatprep.subr.mxu0 0.0
  %229 = vmatpush1.msra.mxu0 0.0
  %230 = vmatprep.subr.mxu0 0.0
  %231 = vmatpush1.msra.mxu0 0.0
  %232 = vmatprep.subr.mxu0 0.0
  %233 = vmatpush1.msra.mxu0 0.0
  %234 = vmatprep.subr.mxu0 0.0
  %235 = vmatpush1.msra.mxu0 0.0
  %236 = vmatprep.subr.mxu0 0.0
  %237 = vmatpush1.msra.mxu0 0.0
  %238 = vmatprep.subr.mxu0 0.0
  %239 = vmatpush1.msra.mxu0 0.0
  %240 = vmatprep.subr.mxu0 0.0
  %241 = vmatpush1.msra.mxu0 0.0
  %242 = vmatprep.subr.mxu0 0.0
  %243 = vmatpush1.msra.mxu0 0.0
  %244 = vmatprep.subr.mxu0 0.0
  %245 = vmatpush1.msra.mxu0 0.0
  %246 = vmatprep.subr.mxu0 0.0
  %247 = vmatpush1.msra.mxu0 0.0
  %248 = vmatprep.subr.mxu0 0.0
  %249 = vmatpush1.msra.mxu0 0.0
  %250 = vmatprep.subr.mxu0 0.0
  %251 = vmatpush1.msra.mxu0 0.0
  %252 = vmatprep.subr.mxu0 0.0
  %253 = vmatpush1.msra.mxu0 0.0
  %254 = vmatprep.subr.mxu0 0.0
  %255 = vmatpush1.msra.mxu0 0.0
  %256 = vmatprep.subr.mxu0 0.0
  %257 = vmatpush1.msra.mxu0 0.0
  %258 = vmatprep.subr.mxu0 0.0
  %259 = vmatpush1.msra.mxu0 0.0
  %260 = vmatprep.subr.mxu0 0.0
  %261 = vmatpush1.msra.mxu0 0.0
  %262 = vmatprep.subr.mxu0 0.0
  %263 = vmatpush1.msra.mxu0 0.0
  %264 = vmatprep.subr.mxu0 0.0
  %265 = vmatpush1.msra.mxu0 0.0
  %266 = vmatprep.mubr.f32.mxu0 0.0
  %267 = vmatmul.mubr.f32.gmra.mrb[0].mxu0 %v197
  %v268 = vpop.f32.mrb[0].mxu0
  %v269 = vadd.f32 0.0, %v268
  %v270 = vpop.f32.mrb[0].mxu0
  %271 = vdwg.mxu0
  %v272 = vadd.f32 %v192, %v269
  %v273 = vld [vmem:[%s6] sm:$0x1]
  %v275 = vlaneseq
  %v276 = vshrl.u32 %v275, 7
  %v277 = vsub.s32 0, %v276
  %v278 = vrot.slane %v273, %v277
  %v280 = vadd.f32 %v272, %v278
  %v281 = vmax.f32 %v280, 0.0
  %v282 = vld [vmem:[%s7] sm:$0xff]
  %v283 = vld [vmem:[%s7 + $0x8] sm:$0xff]
  %v284 = vld [vmem:[%s7 + $0x10] sm:$0xff]
  %v285 = vld [vmem:[%s7 + $0x18] sm:$0xff]
  %v286 = vld [vmem:[%s8] sm:$0x1]
  %v288 = vlaneseq
  %v289 = vshrl.u32 %v288, 7
  %v290 = vsub.s32 0, %v289
  %v291 = vrot.slane %v286, %v290
  %vm293 = vcmask 261120
  %v295 = vsel %vm293, %v281, 0
  %297 = vmatprep.subr.mxu0 0.0
  %298 = vmatpush1.msra.mxu0 %v282
  %299 = vmatprep.subr.mxu0 0.0
  %300 = vmatpush1.msra.mxu0 %v283
  %301 = vmatprep.subr.mxu0 0.0
  %302 = vmatpush1.msra.mxu0 %v284
  %303 = vmatprep.subr.mxu0 0.0
  %304 = vmatpush1.msra.mxu0 %v285
  %305 = vmatprep.subr.mxu0 0.0
  %306 = vmatpush1.msra.mxu0 0.0
  %307 = vmatprep.subr.mxu0 0.0
  %308 = vmatpush1.msra.mxu0 0.0
  %309 = vmatprep.subr.mxu0 0.0
  %310 = vmatpush1.msra.mxu0 0.0
  %311 = vmatprep.subr.mxu0 0.0
  %312 = vmatpush1.msra.mxu0 0.0
  %313 = vmatprep.subr.mxu0 0.0
  %314 = vmatpush1.msra.mxu0 0.0
  %315 = vmatprep.subr.mxu0 0.0
  %316 = vmatpush1.msra.mxu0 0.0
  %317 = vmatprep.subr.mxu0 0.0
  %318 = vmatpush1.msra.mxu0 0.0
  %319 = vmatprep.subr.mxu0 0.0
  %320 = vmatpush1.msra.mxu0 0.0
  %321 = vmatprep.subr.mxu0 0.0
  %322 = vmatpush1.msra.mxu0 0.0
  %323 = vmatprep.subr.mxu0 0.0
  %324 = vmatpush1.msra.mxu0 0.0
  %325 = vmatprep.subr.mxu0 0.0
  %326 = vmatpush1.msra.mxu0 0.0
  %327 = vmatprep.subr.mxu0 0.0
  %328 = vmatpush1.msra.mxu0 0.0
  %329 = vmatprep.subr.mxu0 0.0
  %330 = vmatpush1.msra.mxu0 0.0
  %331 = vmatprep.subr.mxu0 0.0
  %332 = vmatpush1.msra.mxu0 0.0
  %333 = vmatprep.subr.mxu0 0.0
  %334 = vmatpush1.msra.mxu0 0.0
  %335 = vmatprep.subr.mxu0 0.0
  %336 = vmatpush1.msra.mxu0 0.0
  %337 = vmatprep.subr.mxu0 0.0
  %338 = vmatpush1.msra.mxu0 0.0
  %339 = vmatprep.subr.mxu0 0.0
  %340 = vmatpush1.msra.mxu0 0.0
  %341 = vmatprep.subr.mxu0 0.0
  %342 = vmatpush1.msra.mxu0 0.0
  %343 = vmatprep.subr.mxu0 0.0
  %344 = vmatpush1.msra.mxu0 0.0
  %345 = vmatprep.subr.mxu0 0.0
  %346 = vmatpush1.msra.mxu0 0.0
  %347 = vmatprep.subr.mxu0 0.0
  %348 = vmatpush1.msra.mxu0 0.0
  %349 = vmatprep.subr.mxu0 0.0
  %350 = vmatpush1.msra.mxu0 0.0
  %351 = vmatprep.subr.mxu0 0.0
  %352 = vmatpush1.msra.mxu0 0.0
  %353 = vmatprep.subr.mxu0 0.0
  %354 = vmatpush1.msra.mxu0 0.0
  %355 = vmatprep.subr.mxu0 0.0
  %356 = vmatpush1.msra.mxu0 0.0
  %357 = vmatprep.subr.mxu0 0.0
  %358 = vmatpush1.msra.mxu0 0.0
  %359 = vmatprep.subr.mxu0 0.0
  %360 = vmatpush1.msra.mxu0 0.0
  %361 = vmatprep.mubr.f32.mxu0 0.0
  %362 = vmatmul.mubr.f32.gmra.mrb[0].mxu0 %v295
  %v363 = vpop.f32.mrb[0].mxu0
  %v364 = vadd.f32 %v291, %v363
  %v365 = vpop.f32.mrb[0].mxu0
  %366 = vdwg.mxu0
  %v367 = vmax.f32 %v364, 0.0
  %v368 = vld [vmem:[%s9] sm:$0xff]
  %v369 = vld [vmem:[%s9 + $0x8] sm:$0xff]
  %v370 = vld [vmem:[%s9 + $0x10] sm:$0xff]
  %v371 = vld [vmem:[%s9 + $0x18] sm:$0xff]
  %v372 = vld [vmem:[%s10] sm:$0x1]
  %v374 = vlaneseq
  %v375 = vshrl.u32 %v374, 7
  %v376 = vsub.s32 0, %v375
  %v377 = vrot.slane %v372, %v376
  %v380 = vsel %vm293, %v367, 0
  %382 = vmatprep.subr.mxu0 0.0
  %383 = vmatpush1.msra.mxu0 %v368
  %384 = vmatprep.subr.mxu0 0.0
  %385 = vmatpush1.msra.mxu0 %v369
  %386 = vmatprep.subr.mxu0 0.0
  %387 = vmatpush1.msra.mxu0 %v370
  %388 = vmatprep.subr.mxu0 0.0
  %389 = vmatpush1.msra.mxu0 %v371
  %390 = vmatprep.subr.mxu0 0.0
  %391 = vmatpush1.msra.mxu0 0.0
  %392 = vmatprep.subr.mxu0 0.0
  %393 = vmatpush1.msra.mxu0 0.0
  %394 = vmatprep.subr.mxu0 0.0
  %395 = vmatpush1.msra.mxu0 0.0
  %396 = vmatprep.subr.mxu0 0.0
  %397 = vmatpush1.msra.mxu0 0.0
  %398 = vmatprep.subr.mxu0 0.0
  %399 = vmatpush1.msra.mxu0 0.0
  %400 = vmatprep.subr.mxu0 0.0
  %401 = vmatpush1.msra.mxu0 0.0
  %402 = vmatprep.subr.mxu0 0.0
  %403 = vmatpush1.msra.mxu0 0.0
  %404 = vmatprep.subr.mxu0 0.0
  %405 = vmatpush1.msra.mxu0 0.0
  %406 = vmatprep.subr.mxu0 0.0
  %407 = vmatpush1.msra.mxu0 0.0
  %408 = vmatprep.subr.mxu0 0.0
  %409 = vmatpush1.msra.mxu0 0.0
  %410 = vmatprep.subr.mxu0 0.0
  %411 = vmatpush1.msra.mxu0 0.0
  %412 = vmatprep.subr.mxu0 0.0
  %413 = vmatpush1.msra.mxu0 0.0
  %414 = vmatprep.subr.mxu0 0.0
  %415 = vmatpush1.msra.mxu0 0.0
  %416 = vmatprep.subr.mxu0 0.0
  %417 = vmatpush1.msra.mxu0 0.0
  %418 = vmatprep.subr.mxu0 0.0
  %419 = vmatpush1.msra.mxu0 0.0
  %420 = vmatprep.subr.mxu0 0.0
  %421 = vmatpush1.msra.mxu0 0.0
  %422 = vmatprep.subr.mxu0 0.0
  %423 = vmatpush1.msra.mxu0 0.0
  %424 = vmatprep.subr.mxu0 0.0
  %425 = vmatpush1.msra.mxu0 0.0
  %426 = vmatprep.subr.mxu0 0.0
  %427 = vmatpush1.msra.mxu0 0.0
  %428 = vmatprep.subr.mxu0 0.0
  %429 = vmatpush1.msra.mxu0 0.0
  %430 = vmatprep.subr.mxu0 0.0
  %431 = vmatpush1.msra.mxu0 0.0
  %432 = vmatprep.subr.mxu0 0.0
  %433 = vmatpush1.msra.mxu0 0.0
  %434 = vmatprep.subr.mxu0 0.0
  %435 = vmatpush1.msra.mxu0 0.0
  %436 = vmatprep.subr.mxu0 0.0
  %437 = vmatpush1.msra.mxu0 0.0
  %438 = vmatprep.subr.mxu0 0.0
  %439 = vmatpush1.msra.mxu0 0.0
  %440 = vmatprep.subr.mxu0 0.0
  %441 = vmatpush1.msra.mxu0 0.0
  %442 = vmatprep.subr.mxu0 0.0
  %443 = vmatpush1.msra.mxu0 0.0
  %444 = vmatprep.subr.mxu0 0.0
  %445 = vmatpush1.msra.mxu0 0.0
  %446 = vmatprep.mubr.f32.mxu0 0.0
  %447 = vmatmul.mubr.f32.gmra.mrb[0].mxu0 %v380
  %v448 = vpop.f32.mrb[0].mxu0
  %v449 = vadd.f32 %v377, %v448
  %v450 = vpop.f32.mrb[0].mxu0
  %451 = vdwg.mxu0
  %v452 = vtanh.pop %v449
  %v453 = vmul.f32 %v452, 0.05
  %v454 = vadd.f32 %v453, %v38
  %v455 = vmax.f32 %v454, -1.0
  %v456 = vmin.f32 %v455, 1.0
  %457 = vst.msk [vmem:[%s11] sm:$0xff] %vm43, %v456
  // Predicated region
  $region46: #{tpu_custom_call.1} parent=0 // pred_check
    _
  $region47: #{tpu_custom_call.1} parent=0 // pred_check_branch
    %459 = sbr.rel (0) target = $region49
  $region48: #{tpu_custom_call.1} parent=0 // pred_region
    _
  $region49: #{tpu_custom_call.1} parent=0 // pred_fallthru
    _
  // Predicated region
  $region50: #{tpu_custom_call.1} parent=0 // pred_check
    _
  $region51: #{tpu_custom_call.1} parent=0 // pred_check_branch
    %461 = sbr.rel (0) target = $region53
  $region52: #{tpu_custom_call.1} parent=0 // pred_region
    _
  $region53: #{tpu_custom_call.1} parent=0 // pred_fallthru
    _

</llo_original>
